<compile_context>
chip_gen: v6e
topology: v6e:2x2x1
jax: 0.10.0
libtpu: 0.0.40
codegen_flags: <defaults>
</compile_context>

<pallas_src>
from functools import partial

import jax
import jax.numpy as jnp
from jax.experimental import pallas as pl
from jax.experimental.pallas import tpu as pltpu

_LANES = 128
_SUBLANES = 8
_DEFAULT_TILE_ROWS = 4096  # (4096, 128) f32 = 2 MiB per tile


def _make_threshold_kernel(level):
    level_f = float(level)  # Python float -> weak-typed compare (matches PyTorch promotion)

    def kernel(x_ref, y_ref):
        # x_ref : VMEM tile (tile_rows, 128)
        # y_ref : VMEM tile (tile_rows, 128) float32
        y_ref[...] = (x_ref[...] > level_f).astype(jnp.float32)

    return kernel


def _round_up(a, b):
    return ((a + b - 1) // b) * b


@partial(jax.jit, static_argnames=("level",))
def thresholding(x, level=0.98):
    """Pallas equivalent of Thresholding.forward. x: any shape, returns float32."""
    orig_shape = x.shape
    n = x.size

    # Flatten to lane-dense 2D slab; pad only to a multiple of 128 and only if needed.
    n_pad = _round_up(n, _LANES)
    x_flat = jnp.ravel(x)
    if n_pad != n:
        x_flat = jnp.pad(x_flat, (0, n_pad - n))
    rows = n_pad // _LANES
    x2d = x_flat.reshape(rows, _LANES)

    # Tile rows: multiple of 8 (sublane), capped so 2x(in+out) double buffers
    # stay at ~8 MiB; shrink for small inputs so we don't request an oversized block.
    tile_rows = min(_DEFAULT_TILE_ROWS, _round_up(rows, _SUBLANES))
    grid = (pl.cdiv(rows, tile_rows),)

    y2d = pl.pallas_call(
        _make_threshold_kernel(level),
        out_shape=jax.ShapeDtypeStruct((rows, _LANES), jnp.float32),
        grid=grid,
        in_specs=[pl.BlockSpec((tile_rows, _LANES), lambda i: (i, 0))],
        out_specs=pl.BlockSpec((tile_rows, _LANES), lambda i: (i, 0)),
        compiler_params=pltpu.CompilerParams(
            dimension_semantics=("parallel",),
        ),
    )(x2d)

    y_flat = y2d.reshape(-1)
    if n_pad != n:
        y_flat = y_flat[:n]
    return y_flat.reshape(orig_shape)


if __name__ == "__main__":
    key = jax.random.PRNGKey(0)
    # Small NCHW input consistent with the module's usage.
    x = jax.random.uniform(key, (2, 4, 16, 16), dtype=jnp.float32, minval=0.0, maxval=2.0)

    y = thresholding(x, level=0.98)
    jax.block_until_ready(y)

    # Reference check in plain JAX.
    y_ref = (x > 0.98).astype(jnp.float32)
    assert y.shape == x.shape
    assert y.dtype == jnp.float32
    assert bool(jnp.all(y == y_ref))

    # Also exercise a ragged (non-128-multiple) size to cover the padded path.
    x2 = jax.random.uniform(jax.random.PRNGKey(1), (3, 5, 7), dtype=jnp.float32,
                            minval=0.0, maxval=2.0)
    y2 = thresholding(x2, level=0.98)
    jax.block_until_ready(y2)
    assert bool(jnp.all(y2 == (x2 > 0.98).astype(jnp.float32)))

    print("KERNEL_OK")
</pallas_src>

<mosaic_0001>
module attributes {stable_mosaic.version = 11 : i64} {
  func.func @kernel(%arg0: i32, %arg1: memref<16x128xf32, #tpu.memory_space<vmem>>, %arg2: memref<16x128xf32, #tpu.memory_space<vmem>>) attributes {dimension_semantics = [#tpu.dimension_semantics<parallel>], iteration_bounds = array<i64: 1>, scalar_prefetch = 0 : i64, scratch_operands = 0 : i64, tpu.core_type = #tpu.core_type<tc>, window_params = [{transform_indices = @transform_0, window_bounds = array<i64: 16, 128>}, {transform_indices = @transform_1, window_bounds = array<i64: 16, 128>}]} {
    %c0 = arith.constant 0 : index
    %c0_0 = arith.constant 0 : index
    %0 = vector.load %arg1[%c0, %c0_0] : memref<16x128xf32, #tpu.memory_space<vmem>>, vector<16x128xf32>
    %cst = arith.constant 9.800000e-01 : f32
    %1 = vector.broadcast %cst : f32 to vector<16x128xf32>
    %2 = arith.cmpf ogt, %0, %1 : vector<16x128xf32>
    %3 = arith.extui %2 : vector<16x128xi1> to vector<16x128xi32>
    %4 = arith.sitofp %3 : vector<16x128xi32> to vector<16x128xf32>
    %c0_1 = arith.constant 0 : index
    %c0_2 = arith.constant 0 : index
    %5 = vector.load %arg2[%c0_1, %c0_2] : memref<16x128xf32, #tpu.memory_space<vmem>>, vector<16x128xf32>
    tpu.vector_store %arg2[%c0_1, %c0_2], %4 {strides = array<i32>} : memref<16x128xf32, #tpu.memory_space<vmem>>, vector<16x128xf32>,
    return
  }
  func.func @transform_0(%arg0: i32) -> (i32, i32) {
    %c0_i32 = arith.constant 0 : i32
    %c0_i32_0 = arith.constant 0 : i32
    return %arg0, %c0_i32 : i32, i32
  }
  func.func @transform_1(%arg0: i32) -> (i32, i32) {
    %c0_i32 = arith.constant 0 : i32
    %c0_i32_0 = arith.constant 0 : i32
    return %arg0, %c0_i32 : i32, i32
  }
}

</mosaic_0001>

<llo_original>
// kernel: thresholding.1
$region0: #{thresholding.1}
  #allocation0 [shape = 'u32[]', space=smem, size = 0x4, offset = 0x4, fixed_abs, tag = 'smem constant byte address 0x4 - core index']
  #allocation1 [shape = 'u32[144,128]{1,0:T(1,128)}', space=vmem, size = 0x12000, scoped, tag = 'internal scratch']
  %s0 = inlined_call_operand.vmem [shape: f32[16,128], index: 0, kind: input, shape index: {}]
  %s1 = inlined_call_operand.vmem [shape: f32[16,128], index: 1, kind: output, shape index: {}]
  %s2 = sld [smem:[#allocation0]]
  $region14: #{thresholding.1} parent=0
    _
  %s4 = ssub.s32 1, %s2
  %s5 = scalar_select 0, %s4, %s2
  // Predicated region
  $region2: #{thresholding.1} parent=0 // pred_check
    _
  $region3: #{thresholding.1} parent=0 // pred_check_branch
    %7 = sbr.rel (0) target = $region5
  $region4: #{thresholding.1} parent=0 // pred_region
    _
  $region5: #{thresholding.1} parent=0 // pred_fallthru
    _
  %v8 = vld [vmem:[%s0] sm:$0xff]
  %v9 = vld [vmem:[%s0 + $0x8] sm:$0xff]
  %vm10 = vcmp.gt.f32.partialorder %v8, 0.98
  %vm11 = vcmp.gt.f32.partialorder %v9, 0.98
  %v12 = vsel %vm10, 1, 0
  %v13 = vsel %vm11, 1, 0
  %v14 = vcvt.s32.f32 %v12
  %v15 = vcvt.s32.f32 %v13
  %16 = vst [vmem:[%s1] sm:$0xff] %v14
  %17 = vst [vmem:[%s1 + $0x8] sm:$0xff] %v15
  // Predicated region
  $region6: #{thresholding.1} parent=0 // pred_check
    _
  $region7: #{thresholding.1} parent=0 // pred_check_branch
    %19 = sbr.rel (0) target = $region9
  $region8: #{thresholding.1} parent=0 // pred_region
    _
  $region9: #{thresholding.1} parent=0 // pred_fallthru
    _
  // Predicated region
  $region10: #{thresholding.1} parent=0 // pred_check
    _
  $region11: #{thresholding.1} parent=0 // pred_check_branch
    %21 = sbr.rel (0) target = $region13
  $region12: #{thresholding.1} parent=0 // pred_region
    _
  $region13: #{thresholding.1} parent=0 // pred_fallthru
    _

</llo_original>
